<compile_context>
chip_gen: v5e
topology: v5e:2x2
jax: 0.10.0
libtpu: 0.0.40
codegen_flags: <defaults>
</compile_context>

<pallas_src>
import functools

import jax
import jax.numpy as jnp
from jax.experimental import pallas as pl
from jax.experimental.pallas import tpu as pltpu


def _round_up(x, m):
    return (x + m - 1) // m * m


# ---------------------------------------------------------------------------
# Kernel
# ---------------------------------------------------------------------------
def _fused_heads_kernel(x_ref, w_ref, b_ref, o_ref, *, compute_dtype, precision):
    # One MXU matmul over the (un-padded) feature dim, f32 accumulation,
    # bias added on the VPU, lane-dense store.
    x = x_ref[...].astype(compute_dtype)
    acc = jnp.dot(
        x, w_ref[...], preferred_element_type=jnp.float32, precision=precision
    )
    o_ref[...] = (acc + b_ref[...]).astype(o_ref.dtype)


# ---------------------------------------------------------------------------
# Parameter init / packing
# ---------------------------------------------------------------------------
def init_plc_params(key, out_features, architecture):
    """Mimics nn.Linear default init (uniform +/- 1/sqrt(F)) for each head.

    `out_features` is the *input* feature width of each head, matching the
    PyTorch module's constructor argument.
    """
    params = []
    bound = 1.0 / jnp.sqrt(float(out_features))
    for nc in architecture:
        key, kw, kb = jax.random.split(key, 3)
        # PyTorch weight is [nc, F]; store transposed [F, nc] for x @ W^T.
        w_t = jax.random.uniform(
            kw, (out_features, nc), jnp.float32, minval=-bound, maxval=bound
        )
        b = jax.random.uniform(kb, (1, nc), jnp.float32, minval=-bound, maxval=bound)
        params.append((w_t, b))
    return params


def pack_plc_params(params, compute_dtype=jnp.bfloat16):
    """Pack per-head (W_t, b) along the class axis, lane-padded to 128.

    Returns (w_packed [F, N_pad] compute_dtype, b_packed [1, N_pad] f32,
    offsets, sizes).  Padding columns are zero and sliced off after the
    matmul.  Done once at pack time so no per-call weight copies occur.
    """
    sizes = tuple(int(w_t.shape[1]) for (w_t, _) in params)
    n_total = sum(sizes)
    n_pad = _round_up(max(n_total, 1), 128)

    w_cat = jnp.concatenate([w for (w, _) in params], axis=1)   # [F, N]
    b_cat = jnp.concatenate([b for (_, b) in params], axis=1)   # [1, N]
    w_packed = jnp.pad(w_cat, ((0, 0), (0, n_pad - n_total))).astype(compute_dtype)
    b_packed = jnp.pad(b_cat, ((0, 0), (0, n_pad - n_total))).astype(jnp.float32)

    offsets, off = [], 0
    for nc in sizes:
        offsets.append(off)
        off += nc
    return w_packed, b_packed, tuple(offsets), sizes


# ---------------------------------------------------------------------------
# Tile planning (explicit VMEM budget)
# ---------------------------------------------------------------------------
def _pick_tiles(B, F, n_pad, x_itemsize, w_itemsize, out_itemsize,
                budget_bytes=12 * (1 << 20)):
    """Pick (tb, tn) so the double-buffered working set stays under budget.

    tn is a multiple of 128 that divides n_pad; tb is a multiple of 8.
    The 12 MiB budget fits comfortably under v5e's 16 MiB default scoped
    VMEM and far under v7x's 64 MiB physical VMEM.
    """
    def working_set(tb, tn):
        return 2 * (
            tb * F * x_itemsize          # features block
            + F * tn * w_itemsize        # weight block
            + tn * 4                     # bias block (f32)
            + tb * tn * out_itemsize     # output block
        )

    tn = next(t for t in (512, 256, 128) if n_pad % t == 0)
    tb = min(_round_up(B, 8), 1024)
    while working_set(tb, tn) > budget_bytes and tb > 8:
        tb = max(8, (tb // 2) // 8 * 8)
    while working_set(tb, tn) > budget_bytes and tn > 128:
        tn //= 2
    return tb, tn


# ---------------------------------------------------------------------------
# Fused forward
# ---------------------------------------------------------------------------
def fused_heads(features, w_packed, b_packed, n_total, *,
                compute_dtype=jnp.bfloat16, out_dtype=jnp.float32):
    """All heads in one pallas_call: y = x @ W_packed + b, sliced to n_total."""
    B, F = features.shape
    f_w, n_pad = w_packed.shape
    assert f_w == F, "packed weights do not match feature width"

    x_itemsize = jnp.dtype(features.dtype).itemsize
    w_itemsize = jnp.dtype(w_packed.dtype).itemsize
    out_itemsize = jnp.dtype(out_dtype).itemsize

    tb, tn = _pick_tiles(B, F, n_pad, x_itemsize, w_itemsize, out_itemsize)
    b_pad = _round_up(B, tb)
    x = features
    if b_pad != B:  # only copies when B is not a multiple of the batch tile
        x = jnp.pad(x, ((0, b_pad - B), (0, 0)))

    grid = (b_pad // tb, n_pad // tn)
    precision = (
        jax.lax.Precision.HIGHEST
        if jnp.dtype(compute_dtype) == jnp.dtype(jnp.float32)
        else None
    )
    kernel = functools.partial(
        _fused_heads_kernel, compute_dtype=compute_dtype, precision=precision
    )

    flops = 2 * b_pad * F * n_pad
    bytes_accessed = (
        b_pad * F * x_itemsize
        + F * n_pad * w_itemsize
        + n_pad * 4
        + b_pad * n_pad * out_itemsize
    )

    out = pl.pallas_call(
        kernel,
        out_shape=jax.ShapeDtypeStruct((b_pad, n_pad), out_dtype),
        grid=grid,
        in_specs=[
            pl.BlockSpec((tb, F), lambda i, j: (i, 0)),   # features tile
            pl.BlockSpec((F, tn), lambda i, j: (0, j)),   # packed weights tile
            pl.BlockSpec((1, tn), lambda i, j: (0, j)),   # packed bias tile
        ],
        out_specs=pl.BlockSpec((tb, tn), lambda i, j: (i, j)),
        compiler_params=pltpu.CompilerParams(
            dimension_semantics=("parallel", "parallel"),
            vmem_limit_bytes=48 * (1 << 20),
        ),
        cost_estimate=pl.CostEstimate(
            flops=flops, transcendentals=0, bytes_accessed=bytes_accessed
        ),
    )(x, w_packed, b_packed)

    # Slice off batch / class padding outside the kernel (stores stay dense).
    return out[:B, :n_total]


def plc_forward(features, w_packed, b_packed, offsets, sizes, *,
                compute_dtype=jnp.bfloat16):
    """Equivalent of PLC.forward with backbone=None: list of per-head logits.

    Note: for genuinely tiny problems a plain XLA dot would beat a standalone
    pallas_call (pure fixed overhead); this always uses the kernel so the
    fused path is exercised.
    """
    n_total = sum(sizes)
    fused = fused_heads(features, w_packed, b_packed, n_total,
                        compute_dtype=compute_dtype)
    return [fused[:, off:off + nc] for off, nc in zip(offsets, sizes)]


def plc_pred_fn(logits):
    """Equivalent of PLC.pred_fn: per-head argmax over the class dim."""
    genus_logits, species_logits = logits
    return jnp.argmax(genus_logits, axis=1), jnp.argmax(species_logits, axis=1)


# TODO(synk): loss_fn (CrossEntropyLoss) is training-time only and not part of
# the forward pass; implement in plain JAX if needed.


if __name__ == "__main__":
    key = jax.random.PRNGKey(0)
    batch = 8
    out_features = 32            # feature width fed to the classifier heads
    architecture = [16, 24]      # [n_genus_classes, n_species_classes]

    key, kx = jax.random.split(key)
    features = jax.random.normal(kx, (batch, out_features), jnp.float32)
    params = init_plc_params(key, out_features, architecture)

    # --- default (bf16-storage) path -------------------------------------
    w_bf16, b_f32, offsets, sizes = pack_plc_params(params, jnp.bfloat16)
    logits_bf16 = plc_forward(features, w_bf16, b_f32, offsets, sizes,
                              compute_dtype=jnp.bfloat16)
    logits_bf16 = [jax.block_until_ready(l) for l in logits_bf16]

    for (w_t, b), out in zip(params, logits_bf16):
        xb = features.astype(jnp.bfloat16).astype(jnp.float32)
        wb = w_t.astype(jnp.bfloat16).astype(jnp.float32)
        ref = jnp.dot(xb, wb, precision=jax.lax.Precision.HIGHEST) + b
        assert out.shape == ref.shape
        assert jnp.allclose(out, ref, atol=1e-3, rtol=1e-3)

    # --- exact f32 path (Precision.HIGHEST) -------------------------------
    w_f32, b_f32b, offsets, sizes = pack_plc_params(params, jnp.float32)
    logits_f32 = plc_forward(features, w_f32, b_f32b, offsets, sizes,
                             compute_dtype=jnp.float32)
    logits_f32 = [jax.block_until_ready(l) for l in logits_f32]

    for (w_t, b), out in zip(params, logits_f32):
        ref = jnp.dot(features, w_t, precision=jax.lax.Precision.HIGHEST) + b
        assert out.shape == ref.shape
        assert jnp.allclose(out, ref, atol=1e-4, rtol=1e-4)

    # pred_fn equivalent (argmax over the class dim).
    genus_pred, species_pred = plc_pred_fn(logits_bf16)
    genus_pred = jax.block_until_ready(genus_pred)
    species_pred = jax.block_until_ready(species_pred)
    assert genus_pred.shape == (batch,) and species_pred.shape == (batch,)

    print("KERNEL_OK")
</pallas_src>

<mosaic_0001>
module attributes {stable_mosaic.version = 11 : i64} {
  func.func @_fused_heads_kernel(%arg0: i32, %arg1: i32, %arg2: memref<8x32xf32, #tpu.memory_space<vmem>>, %arg3: memref<32x128xbf16, #tpu.memory_space<vmem>>, %arg4: memref<1x128xf32, #tpu.memory_space<vmem>>, %arg5: memref<8x128xf32, #tpu.memory_space<vmem>>) attributes {dimension_semantics = [#tpu.dimension_semantics<parallel>, #tpu.dimension_semantics<parallel>], iteration_bounds = array<i64: 1, 1>, scalar_prefetch = 0 : i64, scratch_operands = 0 : i64, tpu.core_type = #tpu.core_type<tc>, window_params = [{transform_indices = @transform_0, window_bounds = array<i64: 8, 32>}, {transform_indices = @transform_1, window_bounds = array<i64: 32, 128>}, {transform_indices = @transform_2, window_bounds = array<i64: 1, 128>}, {transform_indices = @transform_3, window_bounds = array<i64: 8, 128>}]} {
    %c0 = arith.constant 0 : index
    %c0_0 = arith.constant 0 : index
    %0 = vector.load %arg2[%c0, %c0_0] : memref<8x32xf32, #tpu.memory_space<vmem>>, vector<8x32xf32>
    %1 = arith.truncf %0 : vector<8x32xf32> to vector<8x32xbf16>
    %c0_1 = arith.constant 0 : index
    %c0_2 = arith.constant 0 : index
    %2 = vector.load %arg3[%c0_1, %c0_2] : memref<32x128xbf16, #tpu.memory_space<vmem>>, vector<32x128xbf16>
    %cst = arith.constant dense<0.000000e+00> : vector<8x128xf32>
    %3 = tpu.matmul %1, %2, %cst {dimension_numbers = #tpu.dot_dimension_numbers<[1], [0], [0], [1], [0, 0, 1, 1], [], []>} : vector<8x32xbf16>, vector<32x128xbf16>, vector<8x128xf32> -> vector<8x128xf32>
    %c0_3 = arith.constant 0 : index
    %c0_4 = arith.constant 0 : index
    %4 = vector.load %arg4[%c0_3, %c0_4] : memref<1x128xf32, #tpu.memory_space<vmem>>, vector<1x128xf32>
    %5 = vector.broadcast %4 : vector<1x128xf32> to vector<8x128xf32>
    %6 = arith.addf %3, %5 : vector<8x128xf32>
    %c0_5 = arith.constant 0 : index
    %c0_6 = arith.constant 0 : index
    %7 = vector.load %arg5[%c0_5, %c0_6] : memref<8x128xf32, #tpu.memory_space<vmem>>, vector<8x128xf32>
    tpu.vector_store %arg5[%c0_5, %c0_6], %6 {strides = array<i32>} : memref<8x128xf32, #tpu.memory_space<vmem>>, vector<8x128xf32>,
    return
  }
  func.func @transform_0(%arg0: i32, %arg1: i32) -> (i32, i32) {
    %c0_i32 = arith.constant 0 : i32
    %c0_i32_0 = arith.constant 0 : i32
    return %arg0, %c0_i32 : i32, i32
  }
  func.func @transform_1(%arg0: i32, %arg1: i32) -> (i32, i32) {
    %c0_i32 = arith.constant 0 : i32
    %c0_i32_0 = arith.constant 0 : i32
    return %c0_i32, %arg1 : i32, i32
  }
  func.func @transform_2(%arg0: i32, %arg1: i32) -> (i32, i32) {
    %c0_i32 = arith.constant 0 : i32
    %c0_i32_0 = arith.constant 0 : i32
    return %c0_i32, %arg1 : i32, i32
  }
  func.func @transform_3(%arg0: i32, %arg1: i32) -> (i32, i32) {
    %c0_i32 = arith.constant 0 : i32
    return %arg0, %arg1 : i32, i32
  }
}

</mosaic_0001>

<llo_original>
// kernel: tpu_custom_call.1
$region0: #{tpu_custom_call.1}
  #allocation0 [shape = 'u32[]', space=smem, size = 0x4, offset = 0x4, fixed_abs, tag = 'smem constant byte address 0x4 - core index']
  #allocation1 [shape = 'u32[72,128]{1,0:T(1,128)}', space=vmem, size = 0x9000, scoped, tag = 'internal scratch']
  %s0 = inlined_call_operand.hbm [shape: f32[8,32], index: 0, kind: input, shape index: {}]
  %s1 = inlined_call_operand.hbm [shape: bf16[32,128], index: 1, kind: input, shape index: {}]
  %s2 = inlined_call_operand.vmem [shape: f32[1,128], index: 2, kind: input, shape index: {}]
  %s3 = inlined_call_operand.hbm [shape: f32[8,128], index: 3, kind: output, shape index: {}]
  %s4 = sld [smem:[#allocation0]]
  $region30: #{tpu_custom_call.1} parent=0
    _
  %s6 = ssub.s32 1, %s4
  %s7 = scalar_select 0, %s6, %s4
  $region1: #{tpu_custom_call.1} parent=0
    #allocation2 [shape = 'u8[4096]{0}', space=vmem, size = 0x1000, scoped, tag = 'input window, operand 0, single buffered']
    #allocation3 [shape = 's32[1]{0}', space=sflag, size = 0x4, scoped, tag = 'scoped memory for tpu_custom_call.1']
    #allocation4 [shape = 's32[1]{0}', space=sflag, size = 0x4, scoped, tag = 'scoped memory for tpu_custom_call.1']
    #allocation5 [shape = 'u8[8192]{0}', space=vmem, size = 0x2000, scoped, tag = 'input window, operand 1, single buffered']
    #allocation6 [shape = 's32[1]{0}', space=sflag, size = 0x4, scoped, tag = 'scoped memory for tpu_custom_call.1']
    #allocation7 [shape = 'u8[4096]{0}', space=vmem, size = 0x1000, scoped, tag = 'output window, operand 0, single buffered']
    %8 = vsyncpa [#allocation3], 0
    %9 = vsyncpa [#allocation6], 0
    %10 = vsyncpa [#allocation4], 0
    // Predicated region
    $region2: #{tpu_custom_call.1} parent=1 // pred_check
      _
    $region3: #{tpu_custom_call.1} parent=1 // pred_check_branch
      %12 = sbr.rel (0) target = $region5
    $region4: #{tpu_custom_call.1} parent=1 // pred_region
      %14 = vsyncadd [#allocation3], 0
      %s16 = sshll.u32 %s0, 4
      %s17 = int_to_ptr.hbm [resolvable:$true] %s16
      %s18 = sshll.u32 [#allocation2], 4
      %s19 = int_to_ptr.vmem [resolvable:$true] %s18
      %21 = dma.hbm_to_vmem [thread:$0]  %s17, 128, %s19, [#allocation3]
    $region5: #{tpu_custom_call.1} parent=1 // pred_fallthru
      _
    // Predicated region
    $region6: #{tpu_custom_call.1} parent=1 // pred_check
      _
    $region7: #{tpu_custom_call.1} parent=1 // pred_check_branch
      %23 = sbr.rel (0) target = $region9
    $region8: #{tpu_custom_call.1} parent=1 // pred_region
      %25 = vsyncadd [#allocation6], 0
      %s26 = sshll.u32 %s1, 4
      %s27 = int_to_ptr.hbm [resolvable:$true] %s26
      %s28 = sshll.u32 [#allocation5], 4
      %s29 = int_to_ptr.vmem [resolvable:$true] %s28
      %34 = dma.hbm_to_vmem [thread:$0]  %s27, 256, %s29, [#allocation6], 64, 64, 4
    $region9: #{tpu_custom_call.1} parent=1 // pred_fallthru
      _
    // Predicated region
    $region10: #{tpu_custom_call.1} parent=1 // pred_check
      _
    $region11: #{tpu_custom_call.1} parent=1 // pred_check_branch
      %36 = sbr.rel (0) target = $region13
    $region12: #{tpu_custom_call.1} parent=1 // pred_region
      _
    $region13: #{tpu_custom_call.1} parent=1 // pred_fallthru
      _
    // Predicated region
    $region14: #{tpu_custom_call.1} parent=1 // pred_check
      _
    $region15: #{tpu_custom_call.1} parent=1 // pred_check_branch
      %38 = sbr.rel (0) target = $region17
    $region16: #{tpu_custom_call.1} parent=1 // pred_region
      %40 = dma.done [#allocation3], 128
    $region17: #{tpu_custom_call.1} parent=1 // pred_fallthru
      _
    // Predicated region
    $region18: #{tpu_custom_call.1} parent=1 // pred_check
      _
    $region19: #{tpu_custom_call.1} parent=1 // pred_check_branch
      %42 = sbr.rel (0) target = $region21
    $region20: #{tpu_custom_call.1} parent=1 // pred_region
      %44 = dma.done [#allocation6], 256
    $region21: #{tpu_custom_call.1} parent=1 // pred_fallthru
      _
    %v46 = vld [vmem:[#allocation2] sm:$0xff]
    %v47 = vpack.c.bf16 %v46, %v46
    %v48 = vld [vmem:[#allocation5] sm:$0xf]
    %v49 = vld [vmem:[#allocation5 + $0x4] sm:$0xf]
    %v50 = vld [vmem:[#allocation5 + $0x8] sm:$0xf]
    %v51 = vld [vmem:[#allocation5 + $0xc] sm:$0xf]
    %v52 = vld [vmem:[%s2] sm:$0x1]
    %v54 = vperm.slane %v52, 0
    %v60 = vunpack.c.l.b16 %v48
    %v61 = vunpack.c.l.b16 %v49
    %v62 = vunpack.c.l.b16 %v50
    %v63 = vunpack.c.l.b16 %v51
    %v64 = vpack.c.b16 %v61, %v60
    %v65 = vpack.c.b16 %v63, %v62
    %vm68 = vcmask 261120
    %v70 = vsel %vm68, %v47, 0
    %72 = vmatpush.bf16.msra.mxu0 0
    %73 = vmatpush.bf16.msra.mxu0 0
    %74 = vmatpush.bf16.msra.mxu0 0
    %75 = vmatpush.bf16.msra.mxu0 0
    %76 = vmatpush.bf16.msra.mxu0 0
    %77 = vmatpush.bf16.msra.mxu0 0
    %78 = vmatpush.bf16.msra.mxu0 %v65
    %79 = vmatpush.bf16.msra.mxu0 %v64
    %80 = vmatmul.bf16.gmra.mxu0 %v70
    %v81 = vpop.f32.mrf.mxu0
    %v82 = vadd.f32 %v54, %v81
    %v83 = vpop.f32.mrf.mxu0
    %84 = vdwg.mxu0
    %85 = vst [vmem:[#allocation7] sm:$0xff] %v82
    // Predicated region
    $region22: #{tpu_custom_call.1} parent=1 // pred_check
      _
    $region23: #{tpu_custom_call.1} parent=1 // pred_check_branch
      %87 = sbr.rel (0) target = $region25
    $region24: #{tpu_custom_call.1} parent=1 // pred_region
      %89 = vsyncadd [#allocation4], 0
      %s91 = sshll.u32 [#allocation7], 4
      %s92 = int_to_ptr.vmem [resolvable:$true] %s91
      %s93 = sshll.u32 %s3, 4
      %s94 = int_to_ptr.hbm [resolvable:$true] %s93
      %96 = dma.vmem_to_hbm [thread:$0]  %s92, 128, %s94, [#allocation4]
    $region25: #{tpu_custom_call.1} parent=1 // pred_fallthru
      _
    // Predicated region
    $region26: #{tpu_custom_call.1} parent=1 // pred_check
      _
    $region27: #{tpu_custom_call.1} parent=1 // pred_check_branch
      %98 = sbr.rel (0) target = $region29
    $region28: #{tpu_custom_call.1} parent=1 // pred_region
      %100 = dma.done [#allocation4], 128
    $region29: #{tpu_custom_call.1} parent=1 // pred_fallthru
      _
    %101 = vsyncpa [#allocation3], 1
    %102 = vsyncpa [#allocation6], 1
    %103 = vsyncpa [#allocation4], 1

</llo_original>
